<compile_context>
chip_gen: v6e
topology: v6e:2x2x1
jax: 0.10.0
libtpu: 0.0.40
codegen_flags: <defaults>
</compile_context>

<pallas_src>
import jax
import jax.numpy as jnp
from jax.experimental import pallas as pl
from jax.experimental.pallas import tpu as pltpu


def _round_up(x, m):
    return ((x + m - 1) // m) * m


def mlp_kernel(x_ref, w1_ref, b1_ref, w2_ref, b2_ref, w3_ref, b3_ref, o_ref):
    # Cast the activation tile to bf16 only at the MXU operand; keep all
    # elementwise math (bias, relu, log_softmax) in f32 on the VPU/EUP.
    x_bf16 = x_ref[...].astype(jnp.bfloat16)

    # fc1 (bf16 MXU operands, f32 accumulate) + bias + relu.
    # Dropout = identity in eval mode.
    h1 = jnp.dot(x_bf16, w1_ref[...],
                 preferred_element_type=jnp.float32) + b1_ref[...]
    h1 = jnp.maximum(h1, 0.0)

    # fc2 + relu.
    h2 = jnp.dot(h1.astype(jnp.bfloat16), w2_ref[...],
                 preferred_element_type=jnp.float32) + b2_ref[...]
    h2 = jnp.maximum(h2, 0.0)

    # fc3 -> logits over the unpadded 10-wide class axis.
    logits = jnp.dot(h2.astype(jnp.bfloat16), w3_ref[...],
                     preferred_element_type=jnp.float32) + b3_ref[...]

    # log_softmax over dim=1, all in f32.
    m = jnp.max(logits, axis=-1, keepdims=True)
    shifted = logits - m
    lse = jnp.log(jnp.sum(jnp.exp(shifted), axis=-1, keepdims=True))
    o_ref[...] = (shifted - lse).astype(o_ref.dtype)


def _choose_tm(B, block_m):
    """Batch tile size: as large as possible, but guarantee >=2 grid steps when
    B > 16 so the 'parallel' axis shards across v7x's two TensorCores."""
    if B <= 16:
        return _round_up(B, 8)
    half = _round_up(pl.cdiv(B, 2), 16)
    return max(16, min(block_m, half))


def mlp_forward(x, params, *, block_m=2048):
    """x: [B, input_size] f32 (or bf16). Returns [B, output_size] f32 log-probs."""
    w1, b1, w2, b2, w3, b3 = params
    B, d_in = x.shape
    h1_dim = w1.shape[1]
    h2_dim = w2.shape[1]
    out_dim = w3.shape[1]

    TM = _choose_tm(B, block_m)
    grid = (pl.cdiv(B, TM),)       # ragged last tile handled by Pallas edge-block masking

    tile_rows = lambda i: (i, 0)   # x / out: march down the batch
    resident = lambda i: (0, 0)    # weights & biases: same block every step -> VMEM-resident

    # Advisory cost estimate for the XLA scheduler around the custom call.
    param_bytes = sum(int(p.size) * p.dtype.itemsize for p in params)
    cost = pl.CostEstimate(
        flops=2 * B * (d_in * h1_dim + h1_dim * h2_dim + h2_dim * out_dim),
        transcendentals=B * (out_dim + 1),          # exp per class + log per row
        bytes_accessed=int(x.size) * x.dtype.itemsize
        + B * out_dim * 4
        + param_bytes,
    )

    out = pl.pallas_call(
        mlp_kernel,
        out_shape=jax.ShapeDtypeStruct((B, out_dim), jnp.float32),
        grid=grid,
        in_specs=[
            pl.BlockSpec((TM, d_in), tile_rows),   # x tile (original dtype, cast in-kernel)
            pl.BlockSpec(w1.shape, resident),      # w1 (bf16, 784x128)
            pl.BlockSpec(b1.shape, resident),      # b1 (f32, 1x128)
            pl.BlockSpec(w2.shape, resident),      # w2 (bf16, 128x128)
            pl.BlockSpec(b2.shape, resident),      # b2 (f32, 1x128)
            pl.BlockSpec(w3.shape, resident),      # w3 (bf16, 128x10)
            pl.BlockSpec(b3.shape, resident),      # b3 (f32, 1x10)
        ],
        out_specs=pl.BlockSpec((TM, out_dim), tile_rows),
        compiler_params=pltpu.CompilerParams(
            dimension_semantics=("parallel",),
            vmem_limit_bytes=48 * 1024 * 1024,
        ),
        cost_estimate=cost,
    )(x, w1, b1, w2, b2, w3, b3)

    return out


def init_params(key, input_size=28 * 28, output_size=10, layers=(120, 84)):
    """nn.Linear-style U(-1/sqrt(fan_in), 1/sqrt(fan_in)) init.

    Weights are stored pre-transposed as [in, out] in bf16; hidden dims are
    zero-padded to 128 (exact through relu); the final output dim stays 10
    (padding the class dim would corrupt log_softmax).  Biases stay f32.
    """
    logical = [input_size, layers[0], layers[1], output_size]
    padded = [input_size,
              _round_up(layers[0], 128),
              _round_up(layers[1], 128),
              output_size]

    params = []
    keys = jax.random.split(key, 2 * (len(logical) - 1))
    for i in range(len(logical) - 1):
        fan_in, fan_out = logical[i], logical[i + 1]
        p_in, p_out = padded[i], padded[i + 1]
        bound = 1.0 / float(fan_in) ** 0.5
        w = jax.random.uniform(keys[2 * i], (fan_in, fan_out),
                               minval=-bound, maxval=bound, dtype=jnp.float32)
        b = jax.random.uniform(keys[2 * i + 1], (1, fan_out),
                               minval=-bound, maxval=bound, dtype=jnp.float32)
        w = jnp.pad(w, ((0, p_in - fan_in), (0, p_out - fan_out))).astype(jnp.bfloat16)
        b = jnp.pad(b, ((0, 0), (0, p_out - fan_out)))  # f32
        params.extend([w, b])
    return tuple(params)


def mlp_reference(x, params):
    """Pure-JAX reference with identical bf16-operand / f32-accumulate math."""
    w1, b1, w2, b2, w3, b3 = params
    h = x.astype(jnp.bfloat16)
    h = jnp.maximum(jnp.dot(h, w1, preferred_element_type=jnp.float32) + b1, 0.0)
    h = jnp.maximum(jnp.dot(h.astype(jnp.bfloat16), w2,
                            preferred_element_type=jnp.float32) + b2, 0.0)
    logits = jnp.dot(h.astype(jnp.bfloat16), w3,
                     preferred_element_type=jnp.float32) + b3
    return jax.nn.log_softmax(logits, axis=-1)


if __name__ == "__main__":
    key = jax.random.PRNGKey(0)
    k_params, k_x = jax.random.split(key)

    B, INPUT_SIZE, OUTPUT_SIZE = 8, 28 * 28, 10
    params = init_params(k_params, input_size=INPUT_SIZE,
                         output_size=OUTPUT_SIZE, layers=(120, 84))
    x = jax.random.normal(k_x, (B, INPUT_SIZE), dtype=jnp.float32)

    out = mlp_forward(x, params)
    out = jax.block_until_ready(out)

    assert out.shape == (B, OUTPUT_SIZE)
    assert bool(jnp.all(jnp.isfinite(out)))

    # log_softmax rows should exponentiate-and-sum to ~1
    row_sums = jnp.sum(jnp.exp(out), axis=1)
    assert bool(jnp.all(jnp.abs(row_sums - 1.0) < 1e-4))

    # match the pure-JAX reference (same bf16 operands / f32 accumulation)
    ref = jax.block_until_ready(mlp_reference(x, params))
    assert bool(jnp.max(jnp.abs(out - ref)) < 1e-2)

    print("KERNEL_OK")
</pallas_src>

<mosaic_0001>
module attributes {stable_mosaic.version = 11 : i64} {
  func.func @mlp_kernel(%arg0: i32, %arg1: memref<8x784xf32, #tpu.memory_space<vmem>>, %arg2: memref<784x128xbf16, #tpu.memory_space<vmem>>, %arg3: memref<1x128xf32, #tpu.memory_space<vmem>>, %arg4: memref<128x128xbf16, #tpu.memory_space<vmem>>, %arg5: memref<1x128xf32, #tpu.memory_space<vmem>>, %arg6: memref<128x10xbf16, #tpu.memory_space<vmem>>, %arg7: memref<1x10xf32, #tpu.memory_space<vmem>>, %arg8: memref<8x10xf32, #tpu.memory_space<vmem>>) attributes {dimension_semantics = [#tpu.dimension_semantics<parallel>], iteration_bounds = array<i64: 1>, scalar_prefetch = 0 : i64, scratch_operands = 0 : i64, tpu.core_type = #tpu.core_type<tc>, window_params = [{transform_indices = @transform_0, window_bounds = array<i64: 8, 784>}, {pipeline_mode = #tpu.pipeline_mode<synchronous>, transform_indices = @transform_1, window_bounds = array<i64: 784, 128>}, {pipeline_mode = #tpu.pipeline_mode<synchronous>, transform_indices = @transform_2, window_bounds = array<i64: 1, 128>}, {pipeline_mode = #tpu.pipeline_mode<synchronous>, transform_indices = @transform_3, window_bounds = array<i64: 128, 128>}, {pipeline_mode = #tpu.pipeline_mode<synchronous>, transform_indices = @transform_4, window_bounds = array<i64: 1, 128>}, {pipeline_mode = #tpu.pipeline_mode<synchronous>, transform_indices = @transform_5, window_bounds = array<i64: 128, 10>}, {pipeline_mode = #tpu.pipeline_mode<synchronous>, transform_indices = @transform_6, window_bounds = array<i64: 1, 10>}, {transform_indices = @transform_7, window_bounds = array<i64: 8, 10>}]} {
    %c0 = arith.constant 0 : index
    %c0_0 = arith.constant 0 : index
    %0 = vector.load %arg1[%c0, %c0_0] : memref<8x784xf32, #tpu.memory_space<vmem>>, vector<8x784xf32>
    %1 = arith.truncf %0 : vector<8x784xf32> to vector<8x784xbf16>
    %c0_1 = arith.constant 0 : index
    %c0_2 = arith.constant 0 : index
    %2 = vector.load %arg2[%c0_1, %c0_2] : memref<784x128xbf16, #tpu.memory_space<vmem>>, vector<784x128xbf16>
    %cst = arith.constant dense<0.000000e+00> : vector<8x128xf32>
    %3 = tpu.matmul %1, %2, %cst {dimension_numbers = #tpu.dot_dimension_numbers<[1], [0], [0], [1], [0, 0, 1, 1], [], []>} : vector<8x784xbf16>, vector<784x128xbf16>, vector<8x128xf32> -> vector<8x128xf32>
    %c0_3 = arith.constant 0 : index
    %c0_4 = arith.constant 0 : index
    %4 = vector.load %arg3[%c0_3, %c0_4] : memref<1x128xf32, #tpu.memory_space<vmem>>, vector<1x128xf32>
    %5 = vector.broadcast %4 : vector<1x128xf32> to vector<8x128xf32>
    %6 = arith.addf %3, %5 : vector<8x128xf32>
    %cst_5 = arith.constant 0.000000e+00 : f32
    %7 = vector.broadcast %cst_5 : f32 to vector<8x128xf32>
    %8 = arith.maximumf %6, %7 : vector<8x128xf32>
    %9 = arith.truncf %8 : vector<8x128xf32> to vector<8x128xbf16>
    %c0_6 = arith.constant 0 : index
    %c0_7 = arith.constant 0 : index
    %10 = vector.load %arg4[%c0_6, %c0_7] : memref<128x128xbf16, #tpu.memory_space<vmem>>, vector<128x128xbf16>
    %cst_8 = arith.constant dense<0.000000e+00> : vector<8x128xf32>
    %11 = tpu.matmul %9, %10, %cst_8 {dimension_numbers = #tpu.dot_dimension_numbers<[1], [0], [0], [1], [0, 0, 1, 1], [], []>} : vector<8x128xbf16>, vector<128x128xbf16>, vector<8x128xf32> -> vector<8x128xf32>
    %c0_9 = arith.constant 0 : index
    %c0_10 = arith.constant 0 : index
    %12 = vector.load %arg5[%c0_9, %c0_10] : memref<1x128xf32, #tpu.memory_space<vmem>>, vector<1x128xf32>
    %13 = vector.broadcast %12 : vector<1x128xf32> to vector<8x128xf32>
    %14 = arith.addf %11, %13 : vector<8x128xf32>
    %cst_11 = arith.constant 0.000000e+00 : f32
    %15 = vector.broadcast %cst_11 : f32 to vector<8x128xf32>
    %16 = arith.maximumf %14, %15 : vector<8x128xf32>
    %17 = arith.truncf %16 : vector<8x128xf32> to vector<8x128xbf16>
    %c0_12 = arith.constant 0 : index
    %c0_13 = arith.constant 0 : index
    %18 = vector.load %arg6[%c0_12, %c0_13] : memref<128x10xbf16, #tpu.memory_space<vmem>>, vector<128x10xbf16>
    %cst_14 = arith.constant dense<0.000000e+00> : vector<8x10xf32>
    %19 = tpu.matmul %17, %18, %cst_14 {dimension_numbers = #tpu.dot_dimension_numbers<[1], [0], [0], [1], [0, 0, 1, 1], [], []>} : vector<8x128xbf16>, vector<128x10xbf16>, vector<8x10xf32> -> vector<8x10xf32>
    %c0_15 = arith.constant 0 : index
    %c0_16 = arith.constant 0 : index
    %20 = vector.load %arg7[%c0_15, %c0_16] : memref<1x10xf32, #tpu.memory_space<vmem>>, vector<1x10xf32>
    %21 = vector.broadcast %20 : vector<1x10xf32> to vector<8x10xf32>
    %22 = arith.addf %19, %21 : vector<8x10xf32>
    %cst_17 = arith.constant dense<0xFF800000> : vector<8xf32>
    %23 = vector.multi_reduction <maximumf>, %22, %cst_17 [1] : vector<8x10xf32> to vector<8xf32>
    %24 = vector.shape_cast %23 : vector<8xf32> to vector<8x1xf32>
    %25 = vector.broadcast %24 : vector<8x1xf32> to vector<8x10xf32>
    %26 = arith.subf %22, %25 : vector<8x10xf32>
    %27 = math.exp %26 : vector<8x10xf32>
    %cst_18 = arith.constant dense<0.000000e+00> : vector<8xf32>
    %28 = vector.multi_reduction <add>, %27, %cst_18 [1] : vector<8x10xf32> to vector<8xf32>
    %29 = vector.shape_cast %28 : vector<8xf32> to vector<8x1xf32>
    %30 = math.log %29 : vector<8x1xf32>
    %31 = vector.broadcast %30 : vector<8x1xf32> to vector<8x10xf32>
    %32 = arith.subf %26, %31 : vector<8x10xf32>
    %c0_19 = arith.constant 0 : index
    %c0_20 = arith.constant 0 : index
    %33 = vector.load %arg8[%c0_19, %c0_20] : memref<8x10xf32, #tpu.memory_space<vmem>>, vector<8x10xf32>
    tpu.vector_store %arg8[%c0_19, %c0_20], %32 {strides = array<i32>} : memref<8x10xf32, #tpu.memory_space<vmem>>, vector<8x10xf32>,
    return
  }
  func.func @transform_0(%arg0: i32) -> (i32, i32) {
    %c0_i32 = arith.constant 0 : i32
    %c0_i32_0 = arith.constant 0 : i32
    return %arg0, %c0_i32 : i32, i32
  }
  func.func @transform_1(%arg0: i32) -> (i32, i32) {
    %c0_i32 = arith.constant 0 : i32
    %c0_i32_0 = arith.constant 0 : i32
    %c0_i32_1 = arith.constant 0 : i32
    return %c0_i32, %c0_i32_0 : i32, i32
  }
  func.func @transform_2(%arg0: i32) -> (i32, i32) {
    %c0_i32 = arith.constant 0 : i32
    %c0_i32_0 = arith.constant 0 : i32
    %c0_i32_1 = arith.constant 0 : i32
    return %c0_i32, %c0_i32_0 : i32, i32
  }
  func.func @transform_3(%arg0: i32) -> (i32, i32) {
    %c0_i32 = arith.constant 0 : i32
    %c0_i32_0 = arith.constant 0 : i32
    %c0_i32_1 = arith.constant 0 : i32
    return %c0_i32, %c0_i32_0 : i32, i32
  }
  func.func @transform_4(%arg0: i32) -> (i32, i32) {
    %c0_i32 = arith.constant 0 : i32
    %c0_i32_0 = arith.constant 0 : i32
    %c0_i32_1 = arith.constant 0 : i32
    return %c0_i32, %c0_i32_0 : i32, i32
  }
  func.func @transform_5(%arg0: i32) -> (i32, i32) {
    %c0_i32 = arith.constant 0 : i32
    %c0_i32_0 = arith.constant 0 : i32
    %c0_i32_1 = arith.constant 0 : i32
    return %c0_i32, %c0_i32_0 : i32, i32
  }
  func.func @transform_6(%arg0: i32) -> (i32, i32) {
    %c0_i32 = arith.constant 0 : i32
    %c0_i32_0 = arith.constant 0 : i32
    %c0_i32_1 = arith.constant 0 : i32
    return %c0_i32, %c0_i32_0 : i32, i32
  }
  func.func @transform_7(%arg0: i32) -> (i32, i32) {
    %c0_i32 = arith.constant 0 : i32
    %c0_i32_0 = arith.constant 0 : i32
    return %arg0, %c0_i32 : i32, i32
  }
}

</mosaic_0001>

<llo_original>
// kernel: tpu_custom_call.1
$region0: #{tpu_custom_call.1}
  #allocation0 [shape = 'u32[]', space=smem, size = 0x4, offset = 0x4, fixed_abs, tag = 'smem constant byte address 0x4 - core index']
  #allocation1 [shape = 'u32[144,128]{1,0:T(1,128)}', space=vmem, size = 0x12000, scoped, tag = 'internal scratch']
  %s0 = inlined_call_operand.hbm [shape: f32[8,784], index: 0, kind: input, shape index: {}]
  %s1 = inlined_call_operand.hbm [shape: bf16[784,128], index: 1, kind: input, shape index: {}]
  %s2 = inlined_call_operand.vmem [shape: f32[1,128], index: 2, kind: input, shape index: {}]
  %s3 = inlined_call_operand.vmem [shape: bf16[128,128], index: 3, kind: input, shape index: {}]
  %s4 = inlined_call_operand.vmem [shape: f32[1,128], index: 4, kind: input, shape index: {}]
  %s5 = inlined_call_operand.vmem [shape: bf16[128,10], index: 5, kind: input, shape index: {}]
  %s6 = inlined_call_operand.vmem [shape: f32[1,10], index: 6, kind: input, shape index: {}]
  %s7 = inlined_call_operand.hbm [shape: f32[8,10], index: 7, kind: output, shape index: {}]
  %s8 = sld [smem:[#allocation0]]
  $region46: #{tpu_custom_call.1} parent=0
    _
  %s10 = ssub.s32 1, %s8
  %s11 = scalar_select 0, %s10, %s8
  $region1: #{tpu_custom_call.1} parent=0
    #allocation2 [shape = 'u8[28672]{0}', space=vmem, size = 0x7000, scoped, tag = 'input window, operand 0, single buffered']
    #allocation3 [shape = 's32[1]{0}', space=sflag, size = 0x4, scoped, tag = 'scoped memory for tpu_custom_call.1']
    #allocation4 [shape = 's32[1]{0}', space=sflag, size = 0x4, scoped, tag = 'scoped memory for tpu_custom_call.1']
    #allocation5 [shape = 'u8[200704]{0}', space=vmem, size = 0x31000, scoped, tag = 'input window, operand 1, single buffered']
    #allocation6 [shape = 's32[1]{0}', space=sflag, size = 0x4, scoped, tag = 'scoped memory for tpu_custom_call.1']
    #allocation7 [shape = 'u8[4096]{0}', space=vmem, size = 0x1000, scoped, tag = 'output window, operand 0, single buffered']
    %12 = vsyncpa [#allocation3], 0
    %13 = vsyncpa [#allocation6], 0
    %14 = vsyncpa [#allocation4], 0
    // Predicated region
    $region2: #{tpu_custom_call.1} parent=1 // pred_check
      _
    $region3: #{tpu_custom_call.1} parent=1 // pred_check_branch
      %16 = sbr.rel (0) target = $region5
    $region4: #{tpu_custom_call.1} parent=1 // pred_region
      %s18 = ssub.s32 896, 896
      %19 = vsyncadd [#allocation3], %s18
      %s21 = sshll.u32 [#allocation2], 4
      %s22 = int_to_ptr.vmem [resolvable:$true] %s21
      %24 = dma.hbm_to_vmem [thread:$0]  %s0, 896, %s22, [#allocation3]
    $region5: #{tpu_custom_call.1} parent=1 // pred_fallthru
      _
    // Predicated region
    $region6: #{tpu_custom_call.1} parent=1 // pred_check
      _
    $region7: #{tpu_custom_call.1} parent=1 // pred_check_branch
      %26 = sbr.rel (0) target = $region9
    $region8: #{tpu_custom_call.1} parent=1 // pred_region
      %s28 = ssub.s32 6272, 6272
      %29 = vsyncadd [#allocation6], %s28
      %s30 = sshll.u32 [#allocation5], 4
      %s31 = int_to_ptr.vmem [resolvable:$true] %s30
      %36 = dma.hbm_to_vmem [thread:$0]  %s1, 6272, %s31, [#allocation6], 64, 64, 4
    $region9: #{tpu_custom_call.1} parent=1 // pred_fallthru
      _
    // Predicated region
    $region10: #{tpu_custom_call.1} parent=1 // pred_check
      _
    $region11: #{tpu_custom_call.1} parent=1 // pred_check_branch
      %38 = sbr.rel (0) target = $region13
    $region12: #{tpu_custom_call.1} parent=1 // pred_region
      _
    $region13: #{tpu_custom_call.1} parent=1 // pred_fallthru
      _
    // Predicated region
    $region14: #{tpu_custom_call.1} parent=1 // pred_check
      _
    $region15: #{tpu_custom_call.1} parent=1 // pred_check_branch
      %40 = sbr.rel (0) target = $region17
    $region16: #{tpu_custom_call.1} parent=1 // pred_region
      _
    $region17: #{tpu_custom_call.1} parent=1 // pred_fallthru
      _
    // Predicated region
    $region18: #{tpu_custom_call.1} parent=1 // pred_check
      _
    $region19: #{tpu_custom_call.1} parent=1 // pred_check_branch
      %42 = sbr.rel (0) target = $region21
    $region20: #{tpu_custom_call.1} parent=1 // pred_region
      _
    $region21: #{tpu_custom_call.1} parent=1 // pred_fallthru
      _
    // Predicated region
    $region22: #{tpu_custom_call.1} parent=1 // pred_check
      _
    $region23: #{tpu_custom_call.1} parent=1 // pred_check_branch
      %44 = sbr.rel (0) target = $region25
    $region24: #{tpu_custom_call.1} parent=1 // pred_region
      _
    $region25: #{tpu_custom_call.1} parent=1 // pred_fallthru
      _
    // Predicated region
    $region26: #{tpu_custom_call.1} parent=1 // pred_check
      _
    $region27: #{tpu_custom_call.1} parent=1 // pred_check_branch
      %46 = sbr.rel (0) target = $region29
    $region28: #{tpu_custom_call.1} parent=1 // pred_region
      _
    $region29: #{tpu_custom_call.1} parent=1 // pred_fallthru
      _
    // Predicated region
    $region30: #{tpu_custom_call.1} parent=1 // pred_check
      _
    $region31: #{tpu_custom_call.1} parent=1 // pred_check_branch
      %48 = sbr.rel (0) target = $region33
    $region32: #{tpu_custom_call.1} parent=1 // pred_region
      %49 = dma.done [#allocation3], 896
    $region33: #{tpu_custom_call.1} parent=1 // pred_fallthru
      _
    // Predicated region
    $region34: #{tpu_custom_call.1} parent=1 // pred_check
      _
    $region35: #{tpu_custom_call.1} parent=1 // pred_check_branch
      %51 = sbr.rel (0) target = $region37
    $region36: #{tpu_custom_call.1} parent=1 // pred_region
      %52 = dma.done [#allocation6], 6272
    $region37: #{tpu_custom_call.1} parent=1 // pred_fallthru
      _
    %v54 = vld [vmem:[#allocation2] sm:$0xff]
    %v55 = vld [vmem:[#allocation2 + $0x8] sm:$0xff]
    %v56 = vld [vmem:[#allocation2 + $0x10] sm:$0xff]
    %v57 = vld [vmem:[#allocation2 + $0x18] sm:$0xff]
    %v58 = vld [vmem:[#allocation2 + $0x20] sm:$0xff]
    %v59 = vld [vmem:[#allocation2 + $0x28] sm:$0xff]
    %v60 = vld [vmem:[#allocation2 + $0x30] sm:$0xff]
    %v61 = vpack.c.bf16 %v54, %v54
    %v62 = vpack.c.bf16 %v55, %v55
    %v63 = vpack.c.bf16 %v56, %v56
    %v64 = vpack.c.bf16 %v57, %v57
    %v65 = vpack.c.bf16 %v58, %v58
    %v66 = vpack.c.bf16 %v59, %v59
    %v67 = vpack.c.bf16 %v60, %v60
    %v68 = vld [vmem:[#allocation5] sm:$0xf]
    %v69 = vld [vmem:[#allocation5 + $0x4] sm:$0xf]
    %v70 = vld [vmem:[#allocation5 + $0x8] sm:$0xf]
    %v71 = vld [vmem:[#allocation5 + $0xc] sm:$0xf]
    %v72 = vld [vmem:[#allocation5 + $0x10] sm:$0xf]
    %v73 = vld [vmem:[#allocation5 + $0x14] sm:$0xf]
    %v74 = vld [vmem:[#allocation5 + $0x18] sm:$0xf]
    %v75 = vld [vmem:[#allocation5 + $0x1c] sm:$0xf]
    %v76 = vld [vmem:[#allocation5 + $0x20] sm:$0xf]
    %v77 = vld [vmem:[#allocation5 + $0x24] sm:$0xf]
    %v78 = vld [vmem:[#allocation5 + $0x28] sm:$0xf]
    %v79 = vld [vmem:[#allocation5 + $0x2c] sm:$0xf]
    %v80 = vld [vmem:[#allocation5 + $0x30] sm:$0xf]
    %v81 = vld [vmem:[#allocation5 + $0x34] sm:$0xf]
    %v82 = vld [vmem:[#allocation5 + $0x38] sm:$0xf]
    %v83 = vld [vmem:[#allocation5 + $0x3c] sm:$0xf]
    %v84 = vld [vmem:[#allocation5 + $0x40] sm:$0xf]
    %v85 = vld [vmem:[#allocation5 + $0x44] sm:$0xf]
    %v86 = vld [vmem:[#allocation5 + $0x48] sm:$0xf]
    %v87 = vld [vmem:[#allocation5 + $0x4c] sm:$0xf]
    %v88 = vld [vmem:[#allocation5 + $0x50] sm:$0xf]
    %v89 = vld [vmem:[#allocation5 + $0x54] sm:$0xf]
    %v90 = vld [vmem:[#allocation5 + $0x58] sm:$0xf]
    %v91 = vld [vmem:[#allocation5 + $0x5c] sm:$0xf]
    %v92 = vld [vmem:[#allocation5 + $0x60] sm:$0xf]
    %v93 = vld [vmem:[#allocation5 + $0x64] sm:$0xf]
    %v94 = vld [vmem:[#allocation5 + $0x68] sm:$0xf]
    %v95 = vld [vmem:[#allocation5 + $0x6c] sm:$0xf]
    %v96 = vld [vmem:[#allocation5 + $0x70] sm:$0xf]
    %v97 = vld [vmem:[#allocation5 + $0x74] sm:$0xf]
    %v98 = vld [vmem:[#allocation5 + $0x78] sm:$0xf]
    %v99 = vld [vmem:[#allocation5 + $0x7c] sm:$0xf]
    %v100 = vld [vmem:[#allocation5 + $0x80] sm:$0xf]
    %v101 = vld [vmem:[#allocation5 + $0x84] sm:$0xf]
    %v102 = vld [vmem:[#allocation5 + $0x88] sm:$0xf]
    %v103 = vld [vmem:[#allocation5 + $0x8c] sm:$0xf]
    %v104 = vld [vmem:[#allocation5 + $0x90] sm:$0xf]
    %v105 = vld [vmem:[#allocation5 + $0x94] sm:$0xf]
    %v106 = vld [vmem:[#allocation5 + $0x98] sm:$0xf]
    %v107 = vld [vmem:[#allocation5 + $0x9c] sm:$0xf]
    %v108 = vld [vmem:[#allocation5 + $0xa0] sm:$0xf]
    %v109 = vld [vmem:[#allocation5 + $0xa4] sm:$0xf]
    %v110 = vld [vmem:[#allocation5 + $0xa8] sm:$0xf]
    %v111 = vld [vmem:[#allocation5 + $0xac] sm:$0xf]
    %v112 = vld [vmem:[#allocation5 + $0xb0] sm:$0xf]
    %v113 = vld [vmem:[#allocation5 + $0xb4] sm:$0xf]
    %v114 = vld [vmem:[#allocation5 + $0xb8] sm:$0xf]
    %v115 = vld [vmem:[#allocation5 + $0xbc] sm:$0xf]
    %v116 = vld [vmem:[#allocation5 + $0xc0] sm:$0xf]
    %v117 = vld [vmem:[#allocation5 + $0xc4] sm:$0xf]
    %v118 = vld [vmem:[#allocation5 + $0xc8] sm:$0xf]
    %v119 = vld [vmem:[#allocation5 + $0xcc] sm:$0xf]
    %v120 = vld [vmem:[#allocation5 + $0xd0] sm:$0xf]
    %v121 = vld [vmem:[#allocation5 + $0xd4] sm:$0xf]
    %v122 = vld [vmem:[#allocation5 + $0xd8] sm:$0xf]
    %v123 = vld [vmem:[#allocation5 + $0xdc] sm:$0xf]
    %v124 = vld [vmem:[#allocation5 + $0xe0] sm:$0xf]
    %v125 = vld [vmem:[#allocation5 + $0xe4] sm:$0xf]
    %v126 = vld [vmem:[#allocation5 + $0xe8] sm:$0xf]
    %v127 = vld [vmem:[#allocation5 + $0xec] sm:$0xf]
    %v128 = vld [vmem:[#allocation5 + $0xf0] sm:$0xf]
    %v129 = vld [vmem:[#allocation5 + $0xf4] sm:$0xf]
    %v130 = vld [vmem:[#allocation5 + $0xf8] sm:$0xf]
    %v131 = vld [vmem:[#allocation5 + $0xfc] sm:$0xf]
    %v132 = vld [vmem:[#allocation5 + $0x100] sm:$0xf]
    %v133 = vld [vmem:[#allocation5 + $0x104] sm:$0xf]
    %v134 = vld [vmem:[#allocation5 + $0x108] sm:$0xf]
    %v135 = vld [vmem:[#allocation5 + $0x10c] sm:$0xf]
    %v136 = vld [vmem:[#allocation5 + $0x110] sm:$0xf]
    %v137 = vld [vmem:[#allocation5 + $0x114] sm:$0xf]
    %v138 = vld [vmem:[#allocation5 + $0x118] sm:$0xf]
    %v139 = vld [vmem:[#allocation5 + $0x11c] sm:$0xf]
    %v140 = vld [vmem:[#allocation5 + $0x120] sm:$0xf]
    %v141 = vld [vmem:[#allocation5 + $0x124] sm:$0xf]
    %v142 = vld [vmem:[#allocation5 + $0x128] sm:$0xf]
    %v143 = vld [vmem:[#allocation5 + $0x12c] sm:$0xf]
    %v144 = vld [vmem:[#allocation5 + $0x130] sm:$0xf]
    %v145 = vld [vmem:[#allocation5 + $0x134] sm:$0xf]
    %v146 = vld [vmem:[#allocation5 + $0x138] sm:$0xf]
    %v147 = vld [vmem:[#allocation5 + $0x13c] sm:$0xf]
    %v148 = vld [vmem:[#allocation5 + $0x140] sm:$0xf]
    %v149 = vld [vmem:[#allocation5 + $0x144] sm:$0xf]
    %v150 = vld [vmem:[#allocation5 + $0x148] sm:$0xf]
    %v151 = vld [vmem:[#allocation5 + $0x14c] sm:$0xf]
    %v152 = vld [vmem:[#allocation5 + $0x150] sm:$0xf]
    %v153 = vld [vmem:[#allocation5 + $0x154] sm:$0xf]
    %v154 = vld [vmem:[#allocation5 + $0x158] sm:$0xf]
    %v155 = vld [vmem:[#allocation5 + $0x15c] sm:$0xf]
    %v156 = vld [vmem:[#allocation5 + $0x160] sm:$0xf]
    %v157 = vld [vmem:[#allocation5 + $0x164] sm:$0xf]
    %v158 = vld [vmem:[#allocation5 + $0x168] sm:$0xf]
    %v159 = vld [vmem:[#allocation5 + $0x16c] sm:$0xf]
    %v160 = vld [vmem:[#allocation5 + $0x170] sm:$0xf]
    %v161 = vld [vmem:[#allocation5 + $0x174] sm:$0xf]
    %v162 = vld [vmem:[#allocation5 + $0x178] sm:$0xf]
    %v163 = vld [vmem:[#allocation5 + $0x17c] sm:$0xf]
    %v164 = vld [vmem:[#allocation5 + $0x180] sm:$0xf]
    %v165 = vld [vmem:[#allocation5 + $0x184] sm:$0xf]
    %v166 = vld [vmem:[%s2] sm:$0x1]
    %v168 = vlaneseq
    %v169 = vshrl.u32 %v168, 7
    %v170 = vsub.s32 0, %v169
    %v171 = vrot.slane %v166, %v170
    %v271 = vunpack.c.l.b16 %v68
    %v272 = vunpack.c.l.b16 %v69
    %v273 = vunpack.c.l.b16 %v70
    %v274 = vunpack.c.l.b16 %v71
    %v275 = vunpack.c.l.b16 %v72
    %v276 = vunpack.c.l.b16 %v73
    %v277 = vunpack.c.l.b16 %v74
    %v278 = vunpack.c.l.b16 %v75
    %v279 = vunpack.c.l.b16 %v76
    %v280 = vunpack.c.l.b16 %v77
    %v281 = vunpack.c.l.b16 %v78
    %v282 = vunpack.c.l.b16 %v79
    %v283 = vunpack.c.l.b16 %v80
    %v284 = vunpack.c.l.b16 %v81
    %v285 = vunpack.c.l.b16 %v82
    %v286 = vunpack.c.l.b16 %v83
    %v287 = vunpack.c.l.b16 %v84
    %v288 = vunpack.c.l.b16 %v85
    %v289 = vunpack.c.l.b16 %v86
    %v290 = vunpack.c.l.b16 %v87
    %v291 = vunpack.c.l.b16 %v88
    %v292 = vunpack.c.l.b16 %v89
    %v293 = vunpack.c.l.b16 %v90
    %v294 = vunpack.c.l.b16 %v91
    %v295 = vunpack.c.l.b16 %v92
    %v296 = vunpack.c.l.b16 %v93
    %v297 = vunpack.c.l.b16 %v94
    %v298 = vunpack.c.l.b16 %v95
    %v299 = vunpack.c.l.b16 %v96
    %v300 = vunpack.c.l.b16 %v97
    %v301 = vunpack.c.l.b16 %v98
    %v302 = vunpack.c.l.b16 %v99
    %v303 = vunpack.c.l.b16 %v100
    %v304 = vunpack.c.l.b16 %v101
    %v305 = vunpack.c.l.b16 %v102
    %v306 = vunpack.c.l.b16 %v103
    %v307 = vunpack.c.l.b16 %v104
    %v308 = vunpack.c.l.b16 %v105
    %v309 = vunpack.c.l.b16 %v106
    %v310 = vunpack.c.l.b16 %v107
    %v311 = vunpack.c.l.b16 %v108
    %v312 = vunpack.c.l.b16 %v109
    %v313 = vunpack.c.l.b16 %v110
    %v314 = vunpack.c.l.b16 %v111
    %v315 = vunpack.c.l.b16 %v112
    %v316 = vunpack.c.l.b16 %v113
    %v317 = vunpack.c.l.b16 %v114
    %v318 = vunpack.c.l.b16 %v115
    %v319 = vunpack.c.l.b16 %v116
    %v320 = vunpack.c.l.b16 %v117
    %v321 = vunpack.c.l.b16 %v118
    %v322 = vunpack.c.l.b16 %v119
    %v323 = vunpack.c.l.b16 %v120
    %v324 = vunpack.c.l.b16 %v121
    %v325 = vunpack.c.l.b16 %v122
    %v326 = vunpack.c.l.b16 %v123
    %v327 = vunpack.c.l.b16 %v124
    %v328 = vunpack.c.l.b16 %v125
    %v329 = vunpack.c.l.b16 %v126
    %v330 = vunpack.c.l.b16 %v127
    %v331 = vunpack.c.l.b16 %v128
    %v332 = vunpack.c.l.b16 %v129
    %v333 = vunpack.c.l.b16 %v130
    %v334 = vunpack.c.l.b16 %v131
    %v335 = vunpack.c.l.b16 %v132
    %v336 = vunpack.c.l.b16 %v133
    %v337 = vunpack.c.l.b16 %v134
    %v338 = vunpack.c.l.b16 %v135
    %v339 = vunpack.c.l.b16 %v136
    %v340 = vunpack.c.l.b16 %v137
    %v341 = vunpack.c.l.b16 %v138
    %v342 = vunpack.c.l.b16 %v139
    %v343 = vunpack.c.l.b16 %v140
    %v344 = vunpack.c.l.b16 %v141
    %v345 = vunpack.c.l.b16 %v142
    %v346 = vunpack.c.l.b16 %v143
    %v347 = vunpack.c.l.b16 %v144
    %v348 = vunpack.c.l.b16 %v145
    %v349 = vunpack.c.l.b16 %v146
    %v350 = vunpack.c.l.b16 %v147
    %v351 = vunpack.c.l.b16 %v148
    %v352 = vunpack.c.l.b16 %v149
    %v353 = vunpack.c.l.b16 %v150
    %v354 = vunpack.c.l.b16 %v151
    %v355 = vunpack.c.l.b16 %v152
    %v356 = vunpack.c.l.b16 %v153
    %v357 = vunpack.c.l.b16 %v154
    %v358 = vunpack.c.l.b16 %v155
    %v359 = vunpack.c.l.b16 %v156
    %v360 = vunpack.c.l.b16 %v157
    %v361 = vunpack.c.l.b16 %v158
    %v362 = vunpack.c.l.b16 %v159
    %v363 = vunpack.c.l.b16 %v160
    %v364 = vunpack.c.l.b16 %v161
    %v365 = vunpack.c.l.b16 %v162
    %v366 = vunpack.c.l.b16 %v163
    %v367 = vunpack.c.l.b16 %v164
    %v368 = vunpack.c.l.b16 %v165
    %v369 = vpack.c.b16 %v272, %v271
    %v370 = vpack.c.b16 %v274, %v273
    %v371 = vpack.c.b16 %v276, %v275
    %v372 = vpack.c.b16 %v278, %v277
    %v373 = vpack.c.b16 %v280, %v279
    %v374 = vpack.c.b16 %v282, %v281
    %v375 = vpack.c.b16 %v284, %v283
    %v376 = vpack.c.b16 %v286, %v285
    %v377 = vpack.c.b16 %v288, %v287
    %v378 = vpack.c.b16 %v290, %v289
    %v379 = vpack.c.b16 %v292, %v291
    %v380 = vpack.c.b16 %v294, %v293
    %v381 = vpack.c.b16 %v296, %v295
    %v382 = vpack.c.b16 %v298, %v297
    %v383 = vpack.c.b16 %v300, %v299
    %v384 = vpack.c.b16 %v302, %v301
    %v385 = vpack.c.b16 %v304, %v303
    %v386 = vpack.c.b16 %v306, %v305
    %v387 = vpack.c.b16 %v308, %v307
    %v388 = vpack.c.b16 %v310, %v309
    %v389 = vpack.c.b16 %v312, %v311
    %v390 = vpack.c.b16 %v314, %v313
    %v391 = vpack.c.b16 %v316, %v315
    %v392 = vpack.c.b16 %v318, %v317
    %v393 = vpack.c.b16 %v320, %v319
    %v394 = vpack.c.b16 %v322, %v321
    %v395 = vpack.c.b16 %v324, %v323
    %v396 = vpack.c.b16 %v326, %v325
    %v397 = vpack.c.b16 %v328, %v327
    %v398 = vpack.c.b16 %v330, %v329
    %v399 = vpack.c.b16 %v332, %v331
    %v400 = vpack.c.b16 %v334, %v333
    %v401 = vpack.c.b16 %v336, %v335
    %v402 = vpack.c.b16 %v338, %v337
    %v403 = vpack.c.b16 %v340, %v339
    %v404 = vpack.c.b16 %v342, %v341
    %v405 = vpack.c.b16 %v344, %v343
    %v406 = vpack.c.b16 %v346, %v345
    %v407 = vpack.c.b16 %v348, %v347
    %v408 = vpack.c.b16 %v350, %v349
    %v409 = vpack.c.b16 %v352, %v351
    %v410 = vpack.c.b16 %v354, %v353
    %v411 = vpack.c.b16 %v356, %v355
    %v412 = vpack.c.b16 %v358, %v357
    %v413 = vpack.c.b16 %v360, %v359
    %v414 = vpack.c.b16 %v362, %v361
    %v415 = vpack.c.b16 %v364, %v363
    %v416 = vpack.c.b16 %v366, %v365
    %v417 = vpack.c.b16 %v368, %v367
    %vm467 = vcmask 130048
    %v469 = vsel %vm467, %v67, 0
    %471 = vmatprep.subr.bf16.mxu0 0
    %472 = vmatpush1.bf16.msra.mxu0 %v376
    %473 = vmatprep.subr.bf16.mxu0 0
    %474 = vmatpush1.bf16.msra.mxu0 %v375
    %475 = vmatprep.subr.bf16.mxu0 0
    %476 = vmatpush1.bf16.msra.mxu0 %v374
    %477 = vmatprep.subr.bf16.mxu0 0
    %478 = vmatpush1.bf16.msra.mxu0 %v373
    %479 = vmatprep.subr.bf16.mxu0 0
    %480 = vmatpush1.bf16.msra.mxu0 %v372
    %481 = vmatprep.subr.bf16.mxu0 0
    %482 = vmatpush1.bf16.msra.mxu0 %v371
    %483 = vmatprep.subr.bf16.mxu0 0
    %484 = vmatpush1.bf16.msra.mxu0 %v370
    %485 = vmatprep.subr.bf16.mxu0 0
    %486 = vmatpush1.bf16.msra.mxu0 %v369
    %487 = vmatprep.subr.bf16.mxu0 0
    %488 = vmatpush2.bf16.msra.mxu0 %v384
    %489 = vmatprep.subr.bf16.mxu0 0
    %490 = vmatpush2.bf16.msra.mxu0 %v383
    %491 = vmatprep.subr.bf16.mxu0 0
    %492 = vmatpush2.bf16.msra.mxu0 %v382
    %493 = vmatprep.subr.bf16.mxu0 0
    %494 = vmatpush2.bf16.msra.mxu0 %v381
    %495 = vmatprep.subr.bf16.mxu0 0
    %496 = vmatpush2.bf16.msra.mxu0 %v380
    %497 = vmatprep.subr.bf16.mxu0 0
    %498 = vmatpush2.bf16.msra.mxu0 %v379
    %499 = vmatprep.subr.bf16.mxu0 0
    %500 = vmatpush2.bf16.msra.mxu0 %v378
    %501 = vmatprep.subr.bf16.mxu0 0
    %502 = vmatpush2.bf16.msra.mxu0 %v377
    %503 = vmatprep.mubr.bf16.mxu0 %v62
    %504 = vmatmul.mubr.bf16.gmra.mxu0 %v61
    %v505 = vpop.f32.mrf.mxu0
    %v506 = vadd.f32 %v171, %v505
    %v507 = vpop.f32.mrf.mxu0
    %v508 = vpop.f32.mrf.mxu0
    %v509 = vpop.f32.mrf.mxu0
    %510 = vdwg.mxu0
    %511 = vmatprep.subr.bf16.mxu0 0
    %512 = vmatpush1.bf16.msra.mxu0 %v392
    %513 = vmatprep.subr.bf16.mxu0 0
    %514 = vmatpush1.bf16.msra.mxu0 %v391
    %515 = vmatprep.subr.bf16.mxu0 0
    %516 = vmatpush1.bf16.msra.mxu0 %v390
    %517 = vmatprep.subr.bf16.mxu0 0
    %518 = vmatpush1.bf16.msra.mxu0 %v389
    %519 = vmatprep.subr.bf16.mxu0 0
    %520 = vmatpush1.bf16.msra.mxu0 %v388
    %521 = vmatprep.subr.bf16.mxu0 0
    %522 = vmatpush1.bf16.msra.mxu0 %v387
    %523 = vmatprep.subr.bf16.mxu0 0
    %524 = vmatpush1.bf16.msra.mxu0 %v386
    %525 = vmatprep.subr.bf16.mxu0 0
    %526 = vmatpush1.bf16.msra.mxu0 %v385
    %527 = vmatprep.subr.bf16.mxu0 0
    %528 = vmatpush2.bf16.msra.mxu0 %v400
    %529 = vmatprep.subr.bf16.mxu0 0
    %530 = vmatpush2.bf16.msra.mxu0 %v399
    %531 = vmatprep.subr.bf16.mxu0 0
    %532 = vmatpush2.bf16.msra.mxu0 %v398
    %533 = vmatprep.subr.bf16.mxu0 0
    %534 = vmatpush2.bf16.msra.mxu0 %v397
    %535 = vmatprep.subr.bf16.mxu0 0
    %536 = vmatpush2.bf16.msra.mxu0 %v396
    %537 = vmatprep.subr.bf16.mxu0 0
    %538 = vmatpush2.bf16.msra.mxu0 %v395
    %539 = vmatprep.subr.bf16.mxu0 0
    %540 = vmatpush2.bf16.msra.mxu0 %v394
    %541 = vmatprep.subr.bf16.mxu0 0
    %542 = vmatpush2.bf16.msra.mxu0 %v393
    %543 = vmatprep.mubr.bf16.mxu0 %v64
    %544 = vmatmul.mubr.bf16.gmra.mxu0 %v63
    %v545 = vpop.f32.mrf.mxu0
    %v546 = vadd.f32 %v506, %v545
    %v547 = vpop.f32.mrf.mxu0
    %v548 = vpop.f32.mrf.mxu0
    %v549 = vpop.f32.mrf.mxu0
    %550 = vdwg.mxu0
    %551 = vmatprep.subr.bf16.mxu0 0
    %552 = vmatpush1.bf16.msra.mxu0 %v408
    %553 = vmatprep.subr.bf16.mxu0 0
    %554 = vmatpush1.bf16.msra.mxu0 %v407
    %555 = vmatprep.subr.bf16.mxu0 0
    %556 = vmatpush1.bf16.msra.mxu0 %v406
    %557 = vmatprep.subr.bf16.mxu0 0
    %558 = vmatpush1.bf16.msra.mxu0 %v405
    %559 = vmatprep.subr.bf16.mxu0 0
    %560 = vmatpush1.bf16.msra.mxu0 %v404
    %561 = vmatprep.subr.bf16.mxu0 0
    %562 = vmatpush1.bf16.msra.mxu0 %v403
    %563 = vmatprep.subr.bf16.mxu0 0
    %564 = vmatpush1.bf16.msra.mxu0 %v402
    %565 = vmatprep.subr.bf16.mxu0 0
    %566 = vmatpush1.bf16.msra.mxu0 %v401
    %567 = vmatprep.subr.bf16.mxu0 0
    %568 = vmatpush2.bf16.msra.mxu0 %v416
    %569 = vmatprep.subr.bf16.mxu0 0
    %570 = vmatpush2.bf16.msra.mxu0 %v415
    %571 = vmatprep.subr.bf16.mxu0 0
    %572 = vmatpush2.bf16.msra.mxu0 %v414
    %573 = vmatprep.subr.bf16.mxu0 0
    %574 = vmatpush2.bf16.msra.mxu0 %v413
    %575 = vmatprep.subr.bf16.mxu0 0
    %576 = vmatpush2.bf16.msra.mxu0 %v412
    %577 = vmatprep.subr.bf16.mxu0 0
    %578 = vmatpush2.bf16.msra.mxu0 %v411
    %579 = vmatprep.subr.bf16.mxu0 0
    %580 = vmatpush2.bf16.msra.mxu0 %v410
    %581 = vmatprep.subr.bf16.mxu0 0
    %582 = vmatpush2.bf16.msra.mxu0 %v409
    %583 = vmatprep.mubr.bf16.mxu0 %v66
    %584 = vmatmul.mubr.bf16.gmra.mxu0 %v65
    %v585 = vpop.f32.mrf.mxu0
    %v586 = vadd.f32 %v546, %v585
    %v587 = vpop.f32.mrf.mxu0
    %v588 = vpop.f32.mrf.mxu0
    %v589 = vpop.f32.mrf.mxu0
    %590 = vdwg.mxu0
    %591 = vmatprep.subr.bf16.mxu0 0
    %592 = vmatpush1.bf16.msra.mxu0 0
    %593 = vmatprep.subr.bf16.mxu0 0
    %594 = vmatpush1.bf16.msra.mxu0 0
    %595 = vmatprep.subr.bf16.mxu0 0
    %596 = vmatpush1.bf16.msra.mxu0 0
    %597 = vmatprep.subr.bf16.mxu0 0
    %598 = vmatpush1.bf16.msra.mxu0 0
    %599 = vmatprep.subr.bf16.mxu0 0
    %600 = vmatpush1.bf16.msra.mxu0 0
    %601 = vmatprep.subr.bf16.mxu0 0
    %602 = vmatpush1.bf16.msra.mxu0 0
    %603 = vmatprep.subr.bf16.mxu0 0
    %604 = vmatpush1.bf16.msra.mxu0 0
    %605 = vmatprep.subr.bf16.mxu0 0
    %606 = vmatpush1.bf16.msra.mxu0 %v417
    %607 = vmatprep.subr.bf16.mxu0 0
    %608 = vmatpush2.bf16.msra.mxu0 0
    %609 = vmatprep.subr.bf16.mxu0 0
    %610 = vmatpush2.bf16.msra.mxu0 0
    %611 = vmatprep.subr.bf16.mxu0 0
    %612 = vmatpush2.bf16.msra.mxu0 0
    %613 = vmatprep.subr.bf16.mxu0 0
    %614 = vmatpush2.bf16.msra.mxu0 0
    %615 = vmatprep.subr.bf16.mxu0 0
    %616 = vmatpush2.bf16.msra.mxu0 0
    %617 = vmatprep.subr.bf16.mxu0 0
    %618 = vmatpush2.bf16.msra.mxu0 0
    %619 = vmatprep.subr.bf16.mxu0 0
    %620 = vmatpush2.bf16.msra.mxu0 0
    %621 = vmatprep.subr.bf16.mxu0 0
    %622 = vmatpush2.bf16.msra.mxu0 0
    %623 = vmatprep.mubr.bf16.mxu0 0
    %624 = vmatmul.mubr.bf16.gmra.mxu0 %v469
    %v625 = vpop.f32.mrf.mxu0
    %v626 = vadd.f32 %v586, %v625
    %v627 = vpop.f32.mrf.mxu0
    %v628 = vpop.f32.mrf.mxu0
    %v629 = vpop.f32.mrf.mxu0
    %630 = vdwg.mxu0
    %v631 = vmax.f32 %v626, 0.0
    %v632 = vpack.c.bf16 %v631, %v631
    %v633 = vld [vmem:[%s3] sm:$0xf]
    %v634 = vld [vmem:[%s3 + $0x4] sm:$0xf]
    %v635 = vld [vmem:[%s3 + $0x8] sm:$0xf]
    %v636 = vld [vmem:[%s3 + $0xc] sm:$0xf]
    %v637 = vld [vmem:[%s3 + $0x10] sm:$0xf]
    %v638 = vld [vmem:[%s3 + $0x14] sm:$0xf]
    %v639 = vld [vmem:[%s3 + $0x18] sm:$0xf]
    %v640 = vld [vmem:[%s3 + $0x1c] sm:$0xf]
    %v641 = vld [vmem:[%s3 + $0x20] sm:$0xf]
    %v642 = vld [vmem:[%s3 + $0x24] sm:$0xf]
    %v643 = vld [vmem:[%s3 + $0x28] sm:$0xf]
    %v644 = vld [vmem:[%s3 + $0x2c] sm:$0xf]
    %v645 = vld [vmem:[%s3 + $0x30] sm:$0xf]
    %v646 = vld [vmem:[%s3 + $0x34] sm:$0xf]
    %v647 = vld [vmem:[%s3 + $0x38] sm:$0xf]
    %v648 = vld [vmem:[%s3 + $0x3c] sm:$0xf]
    %v649 = vld [vmem:[%s4] sm:$0x1]
    %v651 = vlaneseq
    %v652 = vshrl.u32 %v651, 7
    %v653 = vsub.s32 0, %v652
    %v654 = vrot.slane %v649, %v653
    %v672 = vunpack.c.l.b16 %v633
    %v673 = vunpack.c.l.b16 %v634
    %v674 = vunpack.c.l.b16 %v635
    %v675 = vunpack.c.l.b16 %v636
    %v676 = vunpack.c.l.b16 %v637
    %v677 = vunpack.c.l.b16 %v638
    %v678 = vunpack.c.l.b16 %v639
    %v679 = vunpack.c.l.b16 %v640
    %v680 = vunpack.c.l.b16 %v641
    %v681 = vunpack.c.l.b16 %v642
    %v682 = vunpack.c.l.b16 %v643
    %v683 = vunpack.c.l.b16 %v644
    %v684 = vunpack.c.l.b16 %v645
    %v685 = vunpack.c.l.b16 %v646
    %v686 = vunpack.c.l.b16 %v647
    %v687 = vunpack.c.l.b16 %v648
    %v688 = vpack.c.b16 %v673, %v672
    %v689 = vpack.c.b16 %v675, %v674
    %v690 = vpack.c.b16 %v677, %v676
    %v691 = vpack.c.b16 %v679, %v678
    %v692 = vpack.c.b16 %v681, %v680
    %v693 = vpack.c.b16 %v683, %v682
    %v694 = vpack.c.b16 %v685, %v684
    %v695 = vpack.c.b16 %v687, %v686
    %704 = vmatprep.subr.bf16.mxu0 0
    %705 = vmatpush1.bf16.msra.mxu0 %v695
    %706 = vmatprep.subr.bf16.mxu0 0
    %707 = vmatpush1.bf16.msra.mxu0 %v694
    %708 = vmatprep.subr.bf16.mxu0 0
    %709 = vmatpush1.bf16.msra.mxu0 %v693
    %710 = vmatprep.subr.bf16.mxu0 0
    %711 = vmatpush1.bf16.msra.mxu0 %v692
    %712 = vmatprep.subr.bf16.mxu0 0
    %713 = vmatpush1.bf16.msra.mxu0 %v691
    %714 = vmatprep.subr.bf16.mxu0 0
    %715 = vmatpush1.bf16.msra.mxu0 %v690
    %716 = vmatprep.subr.bf16.mxu0 0
    %717 = vmatpush1.bf16.msra.mxu0 %v689
    %718 = vmatprep.subr.bf16.mxu0 0
    %719 = vmatpush1.bf16.msra.mxu0 %v688
    %720 = vmatprep.subr.bf16.mxu0 0
    %721 = vmatpush2.bf16.msra.mxu0 0
    %722 = vmatprep.subr.bf16.mxu0 0
    %723 = vmatpush2.bf16.msra.mxu0 0
    %724 = vmatprep.subr.bf16.mxu0 0
    %725 = vmatpush2.bf16.msra.mxu0 0
    %726 = vmatprep.subr.bf16.mxu0 0
    %727 = vmatpush2.bf16.msra.mxu0 0
    %728 = vmatprep.subr.bf16.mxu0 0
    %729 = vmatpush2.bf16.msra.mxu0 0
    %730 = vmatprep.subr.bf16.mxu0 0
    %731 = vmatpush2.bf16.msra.mxu0 0
    %732 = vmatprep.subr.bf16.mxu0 0
    %733 = vmatpush2.bf16.msra.mxu0 0
    %734 = vmatprep.subr.bf16.mxu0 0
    %735 = vmatpush2.bf16.msra.mxu0 0
    %736 = vmatprep.mubr.bf16.mxu0 0
    %737 = vmatmul.mubr.bf16.gmra.mxu0 %v632
    %v738 = vpop.f32.mrf.mxu0
    %v739 = vadd.f32 %v654, %v738
    %v740 = vpop.f32.mrf.mxu0
    %v741 = vpop.f32.mrf.mxu0
    %v742 = vpop.f32.mrf.mxu0
    %743 = vdwg.mxu0
    %v744 = vmax.f32 %v739, 0.0
    %v745 = vpack.c.bf16 %v744, %v744
    %v746 = vld [vmem:[%s5] sm:$0xf]
    %v747 = vld [vmem:[%s5 + $0x4] sm:$0xf]
    %v748 = vld [vmem:[%s5 + $0x8] sm:$0xf]
    %v749 = vld [vmem:[%s5 + $0xc] sm:$0xf]
    %v750 = vld [vmem:[%s5 + $0x10] sm:$0xf]
    %v751 = vld [vmem:[%s5 + $0x14] sm:$0xf]
    %v752 = vld [vmem:[%s5 + $0x18] sm:$0xf]
    %v753 = vld [vmem:[%s5 + $0x1c] sm:$0xf]
    %v754 = vld [vmem:[%s5 + $0x20] sm:$0xf]
    %v755 = vld [vmem:[%s5 + $0x24] sm:$0xf]
    %v756 = vld [vmem:[%s5 + $0x28] sm:$0xf]
    %v757 = vld [vmem:[%s5 + $0x2c] sm:$0xf]
    %v758 = vld [vmem:[%s5 + $0x30] sm:$0xf]
    %v759 = vld [vmem:[%s5 + $0x34] sm:$0xf]
    %v760 = vld [vmem:[%s5 + $0x38] sm:$0xf]
    %v761 = vld [vmem:[%s5 + $0x3c] sm:$0xf]
    %v762 = vld [vmem:[%s6] sm:$0x1]
    %v764 = vlaneseq
    %v765 = vshrl.u32 %v764, 7
    %v766 = vsub.s32 0, %v765
    %v767 = vrot.slane %v762, %v766
    %v785 = vunpack.c.l.b16 %v746
    %v786 = vunpack.c.l.b16 %v747
    %v787 = vunpack.c.l.b16 %v748
    %v788 = vunpack.c.l.b16 %v749
    %v789 = vunpack.c.l.b16 %v750
    %v790 = vunpack.c.l.b16 %v751
    %v791 = vunpack.c.l.b16 %v752
    %v792 = vunpack.c.l.b16 %v753
    %v793 = vunpack.c.l.b16 %v754
    %v794 = vunpack.c.l.b16 %v755
    %v795 = vunpack.c.l.b16 %v756
    %v796 = vunpack.c.l.b16 %v757
    %v797 = vunpack.c.l.b16 %v758
    %v798 = vunpack.c.l.b16 %v759
    %v799 = vunpack.c.l.b16 %v760
    %v800 = vunpack.c.l.b16 %v761
    %v801 = vpack.c.b16 %v786, %v785
    %v802 = vpack.c.b16 %v788, %v787
    %v803 = vpack.c.b16 %v790, %v789
    %v804 = vpack.c.b16 %v792, %v791
    %v805 = vpack.c.b16 %v794, %v793
    %v806 = vpack.c.b16 %v796, %v795
    %v807 = vpack.c.b16 %v798, %v797
    %v808 = vpack.c.b16 %v800, %v799
    %817 = vmatprep.subr.bf16.mxu0 0
    %818 = vmatpush1.bf16.msra.mxu0 %v808
    %819 = vmatprep.subr.bf16.mxu0 0
    %820 = vmatpush1.bf16.msra.mxu0 %v807
    %821 = vmatprep.subr.bf16.mxu0 0
    %822 = vmatpush1.bf16.msra.mxu0 %v806
    %823 = vmatprep.subr.bf16.mxu0 0
    %824 = vmatpush1.bf16.msra.mxu0 %v805
    %825 = vmatprep.subr.bf16.mxu0 0
    %826 = vmatpush1.bf16.msra.mxu0 %v804
    %827 = vmatprep.subr.bf16.mxu0 0
    %828 = vmatpush1.bf16.msra.mxu0 %v803
    %829 = vmatprep.subr.bf16.mxu0 0
    %830 = vmatpush1.bf16.msra.mxu0 %v802
    %831 = vmatprep.subr.bf16.mxu0 0
    %832 = vmatpush1.bf16.msra.mxu0 %v801
    %833 = vmatprep.subr.bf16.mxu0 0
    %834 = vmatpush2.bf16.msra.mxu0 0
    %835 = vmatprep.subr.bf16.mxu0 0
    %836 = vmatpush2.bf16.msra.mxu0 0
    %837 = vmatprep.subr.bf16.mxu0 0
    %838 = vmatpush2.bf16.msra.mxu0 0
    %839 = vmatprep.subr.bf16.mxu0 0
    %840 = vmatpush2.bf16.msra.mxu0 0
    %841 = vmatprep.subr.bf16.mxu0 0
    %842 = vmatpush2.bf16.msra.mxu0 0
    %843 = vmatprep.subr.bf16.mxu0 0
    %844 = vmatpush2.bf16.msra.mxu0 0
    %845 = vmatprep.subr.bf16.mxu0 0
    %846 = vmatpush2.bf16.msra.mxu0 0
    %847 = vmatprep.subr.bf16.mxu0 0
    %848 = vmatpush2.bf16.msra.mxu0 0
    %849 = vmatprep.mubr.bf16.mxu0 0
    %850 = vmatmul.mubr.bf16.gmra.mxu0 %v745
    %v851 = vpop.f32.mrf.mxu0
    %v852 = vadd.f32 %v767, %v851
    %v853 = vpop.f32.mrf.mxu0
    %v854 = vpop.f32.mrf.mxu0
    %v855 = vpop.f32.mrf.mxu0
    %856 = vdwg.mxu0
    %vm857 = vcmask 80896
    %v858 = vsel %vm857, %v852, -inf
    %859 = vmax.xlane.f32.xlu0 %v858
    %v860 = vpop.xlane.xlu0 %859
    %v861 = vsub.f32 %v852, %v860
    %v862 = vmul.f32 %v861, 1.442695
    %v863 = vpow.pop %v862
    %v864 = vsel %vm857, %v863, 0.0
    %865 = vadd.xlane.f32.xlu0 %v864
    %v866 = vpop.xlane.xlu0 %865
    %v867 = vlog2.pop %v866
    %v868 = vmul.f32 %v867, 0.6931472
    %v869 = vsub.f32 %v861, %v868
    %870 = vst.msk [vmem:[#allocation7] sm:$0xff] %vm857, %v869
    // Predicated region
    $region38: #{tpu_custom_call.1} parent=1 // pred_check
      _
    $region39: #{tpu_custom_call.1} parent=1 // pred_check_branch
      %872 = sbr.rel (0) target = $region41
    $region40: #{tpu_custom_call.1} parent=1 // pred_region
      %s874 = ssub.s32 128, 128
      %875 = vsyncadd [#allocation4], %s874
      %s877 = sshll.u32 [#allocation7], 4
      %s878 = int_to_ptr.vmem [resolvable:$true] %s877
      %880 = dma.vmem_to_hbm [thread:$0]  %s878, 128, %s7, [#allocation4]
    $region41: #{tpu_custom_call.1} parent=1 // pred_fallthru
      _
    // Predicated region
    $region42: #{tpu_custom_call.1} parent=1 // pred_check
      _
    $region43: #{tpu_custom_call.1} parent=1 // pred_check_branch
      %882 = sbr.rel (0) target = $region45
    $region44: #{tpu_custom_call.1} parent=1 // pred_region
      %883 = dma.done [#allocation4], 128
    $region45: #{tpu_custom_call.1} parent=1 // pred_fallthru
      _
    %884 = vsyncpa [#allocation3], 1
    %885 = vsyncpa [#allocation6], 1
    %886 = vsyncpa [#allocation4], 1

</llo_original>
